<compile_context>
chip_gen: v7x
topology: tpu7x:2x2x1
jax: 0.10.0
libtpu: 0.0.40
codegen_flags: <defaults>
</compile_context>

<pallas_src>
import jax
import jax.numpy as jnp
from jax.experimental import pallas as pl
from jax.experimental.pallas import tpu as pltpu

INPUT_DIM = 784
DIM_LIST = (20, 128, 256)


def _round_up(x, m):
    return ((x + m - 1) // m) * m


def dlgm_generative_kernel(z0_ref, z1_ref, z2_ref,
                           bias_ref,
                           w0_ref, b0_ref,
                           w1_ref, b1_ref,
                           wf_ref, bf_ref,
                           out_ref):
    bf16 = jnp.bfloat16
    f32 = jnp.float32

    # h = bias + z0                                           (tb, 20)   f32
    h = bias_ref[...] + z0_ref[...]

    # h = Linear(20,128)(relu(h)) + z1                        (tb, 128)
    h = jnp.maximum(h, 0.0).astype(bf16)
    h = jnp.dot(h, w0_ref[...], preferred_element_type=f32)
    h = h + b0_ref[...] + z1_ref[...]

    # h = Linear(128,256)(relu(h)) + z2                       (tb, 256)
    h = jnp.maximum(h, 0.0).astype(bf16)
    h = jnp.dot(h, w1_ref[...], preferred_element_type=f32)
    h = h + b1_ref[...] + z2_ref[...]

    # out = sigmoid(Linear(256,784)(relu(h)))                 (tb, 784)
    h = jnp.maximum(h, 0.0).astype(bf16)
    logits = jnp.dot(h, wf_ref[...], preferred_element_type=f32)
    out_ref[...] = jax.nn.sigmoid(logits + bf_ref[...]).astype(out_ref.dtype)


def prepare_params(params):
    """One-time weight prep (hoisted out of the forward): cast MXU operands to
    bf16 once.  Biases stay f32 (added on the VPU with f32 accumulators)."""
    bias, w0, b0, w1, b1, wf, bf = params
    return (bias,
            w0.astype(jnp.bfloat16), b0,
            w1.astype(jnp.bfloat16), b1,
            wf.astype(jnp.bfloat16), bf)


def _pick_tile(batch, batch_tile):
    """Choose a sublane/MXU-friendly batch tile while bounding padding waste."""
    b8 = _round_up(batch, 8)
    if b8 <= batch_tile:
        return b8, b8                       # single grid step, minimal pad
    n_steps = pl.cdiv(b8, batch_tile)
    tile = min(batch_tile, _round_up(-(-b8 // n_steps), 128))
    return tile, _round_up(b8, tile)


def dlgm_generative(z_list, prepared_params, *, batch_tile=512,
                    out_dtype=jnp.float32):
    """Fused DLGM decoder forward.

    z_list          : [z0 (B,20), z1 (B,128), z2 (B,256)] f32
    prepared_params : output of prepare_params() — weights already bf16,
                      stored (in, out); biases (1, out) f32.
    out_dtype       : jnp.float32 (default, matches PyTorch) or jnp.bfloat16
                      to halve HBM writeback if the consumer tolerates it.
    """
    z0, z1, z2 = z_list
    bias, w0b, b0, w1b, b1, wfb, bf = prepared_params
    B = z0.shape[0]
    d0, d1, d2 = DIM_LIST

    tile, B_pad = _pick_tile(B, batch_tile)
    if B_pad != B:
        pad_rows = B_pad - B
        z0 = jnp.pad(z0, ((0, pad_rows), (0, 0)))
        z1 = jnp.pad(z1, ((0, pad_rows), (0, 0)))
        z2 = jnp.pad(z2, ((0, pad_rows), (0, 0)))

    grid = (B_pad // tile,)

    in_specs = [
        pl.BlockSpec((tile, d0), lambda i: (i, 0)),          # z0
        pl.BlockSpec((tile, d1), lambda i: (i, 0)),          # z1
        pl.BlockSpec((tile, d2), lambda i: (i, 0)),          # z2
        pl.BlockSpec((1, d0), lambda i: (0, 0)),             # top-level bias
        pl.BlockSpec((d0, d1), lambda i: (0, 0)),            # W0 (in, out) bf16
        pl.BlockSpec((1, d1), lambda i: (0, 0)),             # b0
        pl.BlockSpec((d1, d2), lambda i: (0, 0)),            # W1 bf16
        pl.BlockSpec((1, d2), lambda i: (0, 0)),             # b1
        pl.BlockSpec((d2, INPUT_DIM), lambda i: (0, 0)),     # W_final bf16
        pl.BlockSpec((1, INPUT_DIM), lambda i: (0, 0)),      # b_final
    ]
    # Full-width (784) last dim: legal BlockSpec (equals array dim), avoids
    # extra writeback bytes and the column-slice copy in the wrapper.
    out_spec = pl.BlockSpec((tile, INPUT_DIM), lambda i: (i, 0))

    out_bytes = jnp.dtype(out_dtype).itemsize
    weight_bytes = (w0b.size + w1b.size + wfb.size) * 2 \
        + (bias.size + b0.size + b1.size + bf.size) * 4
    cost = pl.CostEstimate(
        flops=2 * B_pad * (d0 * d1 + d1 * d2 + d2 * INPUT_DIM),
        transcendentals=B_pad * INPUT_DIM,                   # sigmoid (EUP)
        bytes_accessed=(B_pad * (d0 + d1 + d2) * 4
                        + B_pad * INPUT_DIM * out_bytes
                        + weight_bytes),
    )

    out = pl.pallas_call(
        dlgm_generative_kernel,
        out_shape=jax.ShapeDtypeStruct((B_pad, INPUT_DIM), out_dtype),
        grid_spec=pltpu.PrefetchScalarGridSpec(
            num_scalar_prefetch=0,
            grid=grid,
            in_specs=in_specs,
            out_specs=out_spec,
        ),
        compiler_params=pltpu.CompilerParams(
            dimension_semantics=("parallel",)),
        cost_estimate=cost,
    )(z0, z1, z2, bias, w0b, b0, w1b, b1, wfb, bf)

    # Strip batch padding only (no column slice any more).
    return out[:B] if B_pad != B else out


def init_params(key):
    """Deterministic parameter init matching the module's shapes."""
    d0, d1, d2 = DIM_LIST
    k = jax.random.split(key, 6)
    # Top-level Bias module: zeros(dim_list[0]); kept as (1, d0) row.
    bias = jnp.zeros((1, d0), jnp.float32)
    # Linear layers stored pre-transposed as (in, out); biases as (1, out).
    w0 = jax.random.normal(k[0], (d0, d1), jnp.float32) * 0.05
    b0 = jax.random.normal(k[1], (1, d1), jnp.float32) * 0.05
    w1 = jax.random.normal(k[2], (d1, d2), jnp.float32) * 0.05
    b1 = jax.random.normal(k[3], (1, d2), jnp.float32) * 0.05
    wf = jax.random.normal(k[4], (d2, INPUT_DIM), jnp.float32) * 0.05
    bf = jax.random.normal(k[5], (1, INPUT_DIM), jnp.float32) * 0.05
    return bias, w0, b0, w1, b1, wf, bf


def reference_forward(z_list, params):
    """Pure-JAX f32 reference mirroring the PyTorch forward."""
    z0, z1, z2 = z_list
    bias, w0, b0, w1, b1, wf, bf = params
    h = bias + z0
    h = jnp.maximum(h, 0.0) @ w0 + b0 + z1
    h = jnp.maximum(h, 0.0) @ w1 + b1 + z2
    return jax.nn.sigmoid(jnp.maximum(h, 0.0) @ wf + bf)


if __name__ == "__main__":
    key = jax.random.PRNGKey(0)
    k_param, k0, k1, k2 = jax.random.split(key, 4)

    params = init_params(k_param)
    # One-time weight prep (bf16 cast) hoisted out of the per-call path.
    prepared = prepare_params(params)

    batch = 8
    # sample_prior: z ~ N(0, 1) with shapes (batch, dim) per latent layer.
    z_list = [
        jax.random.normal(k0, (batch, DIM_LIST[0]), jnp.float32),
        jax.random.normal(k1, (batch, DIM_LIST[1]), jnp.float32),
        jax.random.normal(k2, (batch, DIM_LIST[2]), jnp.float32),
    ]

    out = dlgm_generative(z_list, prepared, batch_tile=512)
    out = jax.block_until_ready(out)

    ref = reference_forward(z_list, params)
    assert out.shape == (batch, INPUT_DIM)
    # bf16 MXU operands with f32 accumulation -> loosened tolerance vs f32 ref.
    assert jnp.allclose(out, ref, atol=2e-2, rtol=2e-2), \
        float(jnp.max(jnp.abs(out - ref)))

    print("KERNEL_OK")
</pallas_src>

<mosaic_0001>
module attributes {stable_mosaic.version = 11 : i64} {
  func.func @dlgm_generative_kernel(%arg0: i32, %arg1: memref<8x20xf32, #tpu.memory_space<vmem>>, %arg2: memref<8x128xf32, #tpu.memory_space<vmem>>, %arg3: memref<8x256xf32, #tpu.memory_space<vmem>>, %arg4: memref<1x20xf32, #tpu.memory_space<vmem>>, %arg5: memref<20x128xbf16, #tpu.memory_space<vmem>>, %arg6: memref<1x128xf32, #tpu.memory_space<vmem>>, %arg7: memref<128x256xbf16, #tpu.memory_space<vmem>>, %arg8: memref<1x256xf32, #tpu.memory_space<vmem>>, %arg9: memref<256x784xbf16, #tpu.memory_space<vmem>>, %arg10: memref<1x784xf32, #tpu.memory_space<vmem>>, %arg11: memref<8x784xf32, #tpu.memory_space<vmem>>) attributes {dimension_semantics = [#tpu.dimension_semantics<parallel>], iteration_bounds = array<i64: 1>, scalar_prefetch = 0 : i64, scratch_operands = 0 : i64, tpu.core_type = #tpu.core_type<tc>, window_params = [{transform_indices = @transform_0, window_bounds = array<i64: 8, 20>}, {transform_indices = @transform_1, window_bounds = array<i64: 8, 128>}, {transform_indices = @transform_2, window_bounds = array<i64: 8, 256>}, {pipeline_mode = #tpu.pipeline_mode<synchronous>, transform_indices = @transform_3, window_bounds = array<i64: 1, 20>}, {pipeline_mode = #tpu.pipeline_mode<synchronous>, transform_indices = @transform_4, window_bounds = array<i64: 20, 128>}, {pipeline_mode = #tpu.pipeline_mode<synchronous>, transform_indices = @transform_5, window_bounds = array<i64: 1, 128>}, {pipeline_mode = #tpu.pipeline_mode<synchronous>, transform_indices = @transform_6, window_bounds = array<i64: 128, 256>}, {pipeline_mode = #tpu.pipeline_mode<synchronous>, transform_indices = @transform_7, window_bounds = array<i64: 1, 256>}, {pipeline_mode = #tpu.pipeline_mode<synchronous>, transform_indices = @transform_8, window_bounds = array<i64: 256, 784>}, {pipeline_mode = #tpu.pipeline_mode<synchronous>, transform_indices = @transform_9, window_bounds = array<i64: 1, 784>}, {transform_indices = @transform_10, window_bounds = array<i64: 8, 784>}]} {
    %c0 = arith.constant 0 : index
    %c0_0 = arith.constant 0 : index
    %0 = vector.load %arg4[%c0, %c0_0] : memref<1x20xf32, #tpu.memory_space<vmem>>, vector<1x20xf32>
    %c0_1 = arith.constant 0 : index
    %c0_2 = arith.constant 0 : index
    %1 = vector.load %arg1[%c0_1, %c0_2] : memref<8x20xf32, #tpu.memory_space<vmem>>, vector<8x20xf32>
    %2 = vector.broadcast %0 : vector<1x20xf32> to vector<8x20xf32>
    %3 = arith.addf %2, %1 : vector<8x20xf32>
    %cst = arith.constant 0.000000e+00 : f32
    %4 = vector.broadcast %cst : f32 to vector<8x20xf32>
    %5 = arith.maximumf %3, %4 : vector<8x20xf32>
    %6 = arith.truncf %5 : vector<8x20xf32> to vector<8x20xbf16>
    %c0_3 = arith.constant 0 : index
    %c0_4 = arith.constant 0 : index
    %7 = vector.load %arg5[%c0_3, %c0_4] : memref<20x128xbf16, #tpu.memory_space<vmem>>, vector<20x128xbf16>
    %cst_5 = arith.constant dense<0.000000e+00> : vector<8x128xf32>
    %8 = tpu.matmul %6, %7, %cst_5 {dimension_numbers = #tpu.dot_dimension_numbers<[1], [0], [0], [1], [0, 0, 1, 1], [], []>} : vector<8x20xbf16>, vector<20x128xbf16>, vector<8x128xf32> -> vector<8x128xf32>
    %c0_6 = arith.constant 0 : index
    %c0_7 = arith.constant 0 : index
    %9 = vector.load %arg6[%c0_6, %c0_7] : memref<1x128xf32, #tpu.memory_space<vmem>>, vector<1x128xf32>
    %10 = vector.broadcast %9 : vector<1x128xf32> to vector<8x128xf32>
    %11 = arith.addf %8, %10 : vector<8x128xf32>
    %c0_8 = arith.constant 0 : index
    %c0_9 = arith.constant 0 : index
    %12 = vector.load %arg2[%c0_8, %c0_9] : memref<8x128xf32, #tpu.memory_space<vmem>>, vector<8x128xf32>
    %13 = arith.addf %11, %12 : vector<8x128xf32>
    %cst_10 = arith.constant 0.000000e+00 : f32
    %14 = vector.broadcast %cst_10 : f32 to vector<8x128xf32>
    %15 = arith.maximumf %13, %14 : vector<8x128xf32>
    %16 = arith.truncf %15 : vector<8x128xf32> to vector<8x128xbf16>
    %c0_11 = arith.constant 0 : index
    %c0_12 = arith.constant 0 : index
    %17 = vector.load %arg7[%c0_11, %c0_12] : memref<128x256xbf16, #tpu.memory_space<vmem>>, vector<128x256xbf16>
    %cst_13 = arith.constant dense<0.000000e+00> : vector<8x256xf32>
    %18 = tpu.matmul %16, %17, %cst_13 {dimension_numbers = #tpu.dot_dimension_numbers<[1], [0], [0], [1], [0, 0, 1, 1], [], []>} : vector<8x128xbf16>, vector<128x256xbf16>, vector<8x256xf32> -> vector<8x256xf32>
    %c0_14 = arith.constant 0 : index
    %c0_15 = arith.constant 0 : index
    %19 = vector.load %arg8[%c0_14, %c0_15] : memref<1x256xf32, #tpu.memory_space<vmem>>, vector<1x256xf32>
    %20 = vector.broadcast %19 : vector<1x256xf32> to vector<8x256xf32>
    %21 = arith.addf %18, %20 : vector<8x256xf32>
    %c0_16 = arith.constant 0 : index
    %c0_17 = arith.constant 0 : index
    %22 = vector.load %arg3[%c0_16, %c0_17] : memref<8x256xf32, #tpu.memory_space<vmem>>, vector<8x256xf32>
    %23 = arith.addf %21, %22 : vector<8x256xf32>
    %cst_18 = arith.constant 0.000000e+00 : f32
    %24 = vector.broadcast %cst_18 : f32 to vector<8x256xf32>
    %25 = arith.maximumf %23, %24 : vector<8x256xf32>
    %26 = arith.truncf %25 : vector<8x256xf32> to vector<8x256xbf16>
    %c0_19 = arith.constant 0 : index
    %c0_20 = arith.constant 0 : index
    %27 = vector.load %arg9[%c0_19, %c0_20] : memref<256x784xbf16, #tpu.memory_space<vmem>>, vector<256x784xbf16>
    %cst_21 = arith.constant dense<0.000000e+00> : vector<8x784xf32>
    %28 = tpu.matmul %26, %27, %cst_21 {dimension_numbers = #tpu.dot_dimension_numbers<[1], [0], [0], [1], [0, 0, 1, 1], [], []>} : vector<8x256xbf16>, vector<256x784xbf16>, vector<8x784xf32> -> vector<8x784xf32>
    %c0_22 = arith.constant 0 : index
    %c0_23 = arith.constant 0 : index
    %29 = vector.load %arg10[%c0_22, %c0_23] : memref<1x784xf32, #tpu.memory_space<vmem>>, vector<1x784xf32>
    %30 = vector.broadcast %29 : vector<1x784xf32> to vector<8x784xf32>
    %31 = arith.addf %28, %30 : vector<8x784xf32>
    %32 = arith.negf %31 : vector<8x784xf32>
    %33 = math.exp %32 : vector<8x784xf32>
    %cst_24 = arith.constant 1.000000e+00 : f32
    %34 = vector.broadcast %cst_24 : f32 to vector<8x784xf32>
    %35 = arith.addf %34, %33 : vector<8x784xf32>
    %36 = arith.divf %34, %35 : vector<8x784xf32>
    %c0_25 = arith.constant 0 : index
    %c0_26 = arith.constant 0 : index
    %37 = vector.load %arg11[%c0_25, %c0_26] : memref<8x784xf32, #tpu.memory_space<vmem>>, vector<8x784xf32>
    tpu.vector_store %arg11[%c0_25, %c0_26], %36 {strides = array<i32>} : memref<8x784xf32, #tpu.memory_space<vmem>>, vector<8x784xf32>,
    return
  }
  func.func @transform_0(%arg0: i32) -> (i32, i32) {
    %c0_i32 = arith.constant 0 : i32
    %c0_i32_0 = arith.constant 0 : i32
    return %arg0, %c0_i32 : i32, i32
  }
  func.func @transform_1(%arg0: i32) -> (i32, i32) {
    %c0_i32 = arith.constant 0 : i32
    %c0_i32_0 = arith.constant 0 : i32
    return %arg0, %c0_i32 : i32, i32
  }
  func.func @transform_2(%arg0: i32) -> (i32, i32) {
    %c0_i32 = arith.constant 0 : i32
    %c0_i32_0 = arith.constant 0 : i32
    return %arg0, %c0_i32 : i32, i32
  }
  func.func @transform_3(%arg0: i32) -> (i32, i32) {
    %c0_i32 = arith.constant 0 : i32
    %c0_i32_0 = arith.constant 0 : i32
    %c0_i32_1 = arith.constant 0 : i32
    return %c0_i32, %c0_i32_0 : i32, i32
  }
  func.func @transform_4(%arg0: i32) -> (i32, i32) {
    %c0_i32 = arith.constant 0 : i32
    %c0_i32_0 = arith.constant 0 : i32
    %c0_i32_1 = arith.constant 0 : i32
    return %c0_i32, %c0_i32_0 : i32, i32
  }
  func.func @transform_5(%arg0: i32) -> (i32, i32) {
    %c0_i32 = arith.constant 0 : i32
    %c0_i32_0 = arith.constant 0 : i32
    %c0_i32_1 = arith.constant 0 : i32
    return %c0_i32, %c0_i32_0 : i32, i32
  }
  func.func @transform_6(%arg0: i32) -> (i32, i32) {
    %c0_i32 = arith.constant 0 : i32
    %c0_i32_0 = arith.constant 0 : i32
    %c0_i32_1 = arith.constant 0 : i32
    return %c0_i32, %c0_i32_0 : i32, i32
  }
  func.func @transform_7(%arg0: i32) -> (i32, i32) {
    %c0_i32 = arith.constant 0 : i32
    %c0_i32_0 = arith.constant 0 : i32
    %c0_i32_1 = arith.constant 0 : i32
    return %c0_i32, %c0_i32_0 : i32, i32
  }
  func.func @transform_8(%arg0: i32) -> (i32, i32) {
    %c0_i32 = arith.constant 0 : i32
    %c0_i32_0 = arith.constant 0 : i32
    %c0_i32_1 = arith.constant 0 : i32
    return %c0_i32, %c0_i32_0 : i32, i32
  }
  func.func @transform_9(%arg0: i32) -> (i32, i32) {
    %c0_i32 = arith.constant 0 : i32
    %c0_i32_0 = arith.constant 0 : i32
    %c0_i32_1 = arith.constant 0 : i32
    return %c0_i32, %c0_i32_0 : i32, i32
  }
  func.func @transform_10(%arg0: i32) -> (i32, i32) {
    %c0_i32 = arith.constant 0 : i32
    %c0_i32_0 = arith.constant 0 : i32
    return %arg0, %c0_i32 : i32, i32
  }
}

</mosaic_0001>

<llo_original>
// kernel: tpu_custom_call.1
$region0: #{tpu_custom_call.1}
  #allocation0 [shape = 'u32[]', space=smem, size = 0x4, offset = 0x4, fixed_abs, tag = 'smem constant byte address 0x4 - core index']
  #allocation1 [shape = 'u32[144,128]{1,0:T(1,128)}', space=vmem, size = 0x12000, scoped, tag = 'internal scratch']
  %s0 = inlined_call_operand.vmem [shape: f32[8,20], index: 0, kind: input, shape index: {}]
  %s1 = inlined_call_operand.vmem [shape: f32[8,128], index: 1, kind: input, shape index: {}]
  %s2 = inlined_call_operand.vmem [shape: f32[8,256], index: 2, kind: input, shape index: {}]
  %s3 = inlined_call_operand.vmem [shape: f32[1,20], index: 3, kind: input, shape index: {}]
  %s4 = inlined_call_operand.vmem [shape: bf16[20,128], index: 4, kind: input, shape index: {}]
  %s5 = inlined_call_operand.vmem [shape: f32[1,128], index: 5, kind: input, shape index: {}]
  %s6 = inlined_call_operand.vmem [shape: bf16[128,256], index: 6, kind: input, shape index: {}]
  %s7 = inlined_call_operand.vmem [shape: f32[1,256], index: 7, kind: input, shape index: {}]
  %s8 = inlined_call_operand.vmem [shape: bf16[256,784], index: 8, kind: input, shape index: {}]
  %s9 = inlined_call_operand.vmem [shape: f32[1,784], index: 9, kind: input, shape index: {}]
  %s10 = inlined_call_operand.hbm [shape: f32[8,784], index: 10, kind: output, shape index: {}]
  %s11 = sld [smem:[#allocation0]]
  $region50: #{tpu_custom_call.1} parent=0
    _
  %s13 = ssub.s32 1, %s11
  %s14 = scalar_select 0, %s13, %s11
  $region1: #{tpu_custom_call.1} parent=0
    #allocation2 [shape = 'u8[28672]{0}', space=vmem, size = 0x7000, scoped, tag = 'output window, operand 0, single buffered']
    #allocation3 [shape = 's32[1]{0}', space=sflag, size = 0x4, scoped, tag = 'scoped memory for tpu_custom_call.1']
    %15 = vsyncpa [#allocation3], 0
    // Predicated region
    $region2: #{tpu_custom_call.1} parent=1 // pred_check
      _
    $region3: #{tpu_custom_call.1} parent=1 // pred_check_branch
      %17 = sbr.rel (0) target = $region5
    $region4: #{tpu_custom_call.1} parent=1 // pred_region
      _
    $region5: #{tpu_custom_call.1} parent=1 // pred_fallthru
      _
    // Predicated region
    $region6: #{tpu_custom_call.1} parent=1 // pred_check
      _
    $region7: #{tpu_custom_call.1} parent=1 // pred_check_branch
      %19 = sbr.rel (0) target = $region9
    $region8: #{tpu_custom_call.1} parent=1 // pred_region
      _
    $region9: #{tpu_custom_call.1} parent=1 // pred_fallthru
      _
    // Predicated region
    $region10: #{tpu_custom_call.1} parent=1 // pred_check
      _
    $region11: #{tpu_custom_call.1} parent=1 // pred_check_branch
      %21 = sbr.rel (0) target = $region13
    $region12: #{tpu_custom_call.1} parent=1 // pred_region
      _
    $region13: #{tpu_custom_call.1} parent=1 // pred_fallthru
      _
    // Predicated region
    $region14: #{tpu_custom_call.1} parent=1 // pred_check
      _
    $region15: #{tpu_custom_call.1} parent=1 // pred_check_branch
      %23 = sbr.rel (0) target = $region17
    $region16: #{tpu_custom_call.1} parent=1 // pred_region
      _
    $region17: #{tpu_custom_call.1} parent=1 // pred_fallthru
      _
    // Predicated region
    $region18: #{tpu_custom_call.1} parent=1 // pred_check
      _
    $region19: #{tpu_custom_call.1} parent=1 // pred_check_branch
      %25 = sbr.rel (0) target = $region21
    $region20: #{tpu_custom_call.1} parent=1 // pred_region
      _
    $region21: #{tpu_custom_call.1} parent=1 // pred_fallthru
      _
    // Predicated region
    $region22: #{tpu_custom_call.1} parent=1 // pred_check
      _
    $region23: #{tpu_custom_call.1} parent=1 // pred_check_branch
      %27 = sbr.rel (0) target = $region25
    $region24: #{tpu_custom_call.1} parent=1 // pred_region
      _
    $region25: #{tpu_custom_call.1} parent=1 // pred_fallthru
      _
    // Predicated region
    $region26: #{tpu_custom_call.1} parent=1 // pred_check
      _
    $region27: #{tpu_custom_call.1} parent=1 // pred_check_branch
      %29 = sbr.rel (0) target = $region29
    $region28: #{tpu_custom_call.1} parent=1 // pred_region
      _
    $region29: #{tpu_custom_call.1} parent=1 // pred_fallthru
      _
    // Predicated region
    $region30: #{tpu_custom_call.1} parent=1 // pred_check
      _
    $region31: #{tpu_custom_call.1} parent=1 // pred_check_branch
      %31 = sbr.rel (0) target = $region33
    $region32: #{tpu_custom_call.1} parent=1 // pred_region
      _
    $region33: #{tpu_custom_call.1} parent=1 // pred_fallthru
      _
    // Predicated region
    $region34: #{tpu_custom_call.1} parent=1 // pred_check
      _
    $region35: #{tpu_custom_call.1} parent=1 // pred_check_branch
      %33 = sbr.rel (0) target = $region37
    $region36: #{tpu_custom_call.1} parent=1 // pred_region
      _
    $region37: #{tpu_custom_call.1} parent=1 // pred_fallthru
      _
    // Predicated region
    $region38: #{tpu_custom_call.1} parent=1 // pred_check
      _
    $region39: #{tpu_custom_call.1} parent=1 // pred_check_branch
      %35 = sbr.rel (0) target = $region41
    $region40: #{tpu_custom_call.1} parent=1 // pred_region
      _
    $region41: #{tpu_custom_call.1} parent=1 // pred_fallthru
      _
    %v37 = vld [vmem:[%s3] sm:$0x1]
    %v38 = vld [vmem:[%s0] sm:$0xff]
    %v40 = vlaneseq
    %v41 = vshrl.u32 %v40, 7
    %v42 = vsub.s32 0, %v41
    %v43 = vrot.slane %v37, %v42
    %v45 = vadd.f32 %v43, %v38
    %v46 = vmax.f32 %v45, 0.0
    %v47 = vpack.c.bf16 %v46, %v46
    %v48 = vld [vmem:[%s4] sm:$0xf]
    %v49 = vld [vmem:[%s4 + $0x4] sm:$0xf]
    %v50 = vld [vmem:[%s4 + $0x8] sm:$0x3]
    %v51 = vld [vmem:[%s5] sm:$0x1]
    %v53 = vlaneseq
    %v54 = vshrl.u32 %v53, 7
    %v55 = vsub.s32 0, %v54
    %v56 = vrot.slane %v51, %v55
    %v61 = vunpack.c.l.b16 %v48
    %v62 = vunpack.c.l.b16 %v49
    %v63 = vunpack.c.l.b16 %v50
    %v64 = vpack.c.b16 %v62, %v61
    %v65 = vpack.c.b16 %v63, %v63
    %vm67 = vcmask 162816
    %v69 = vsel %vm67, %v47, 0
    %vm71 = vcmask 1041408
    %v73 = vsel %vm71, %v65, 0
    %75 = vmatprep.subr.bf16.mxu0 0
    %76 = vmatpush1.bf16.msra.mxu0 %v64
    %77 = vmatprep.subr.bf16.mxu0 0
    %78 = vmatpush1.bf16.msra.mxu0 %v73
    %79 = vmatprep.subr.bf16.mxu0 0
    %80 = vmatpush1.bf16.msra.mxu0 0
    %81 = vmatprep.subr.bf16.mxu0 0
    %82 = vmatpush1.bf16.msra.mxu0 0
    %83 = vmatprep.subr.bf16.mxu0 0
    %84 = vmatpush1.bf16.msra.mxu0 0
    %85 = vmatprep.subr.bf16.mxu0 0
    %86 = vmatpush1.bf16.msra.mxu0 0
    %87 = vmatprep.subr.bf16.mxu0 0
    %88 = vmatpush1.bf16.msra.mxu0 0
    %89 = vmatprep.subr.bf16.mxu0 0
    %90 = vmatpush1.bf16.msra.mxu0 0
    %91 = vmatprep.subr.bf16.mxu0 0
    %92 = vmatpush1.bf16.msra.mxu0 0
    %93 = vmatprep.subr.bf16.mxu0 0
    %94 = vmatpush1.bf16.msra.mxu0 0
    %95 = vmatprep.subr.bf16.mxu0 0
    %96 = vmatpush1.bf16.msra.mxu0 0
    %97 = vmatprep.subr.bf16.mxu0 0
    %98 = vmatpush1.bf16.msra.mxu0 0
    %99 = vmatprep.subr.bf16.mxu0 0
    %100 = vmatpush1.bf16.msra.mxu0 0
    %101 = vmatprep.subr.bf16.mxu0 0
    %102 = vmatpush1.bf16.msra.mxu0 0
    %103 = vmatprep.subr.bf16.mxu0 0
    %104 = vmatpush1.bf16.msra.mxu0 0
    %105 = vmatprep.subr.bf16.mxu0 0
    %106 = vmatpush1.bf16.msra.mxu0 0
    %107 = vmatprep.mubr.bf16.mxu0 0
    %108 = vmatmul.mubr.bf16.gmra.mrb[0].mxu0 %v69
    %v109 = vpop.f32.mrb[0].mxu0
    %v110 = vadd.f32 %v56, %v109
    %v111 = vpop.f32.mrb[0].mxu0
    %v112 = vpop.f32.mrb[0].mxu0
    %v113 = vpop.f32.mrb[0].mxu0
    %114 = vdwg.mxu0
    %v115 = vld [vmem:[%s1] sm:$0xff]
    %v116 = vadd.f32 %v110, %v115
    %v117 = vmax.f32 %v116, 0.0
    %v118 = vpack.c.bf16 %v117, %v117
    %v119 = vld [vmem:[%s6] sm:$0xff]
    %v120 = vld [vmem:[%s6 + $0x8] sm:$0xff]
    %v121 = vld [vmem:[%s6 + $0x10] sm:$0xff]
    %v122 = vld [vmem:[%s6 + $0x18] sm:$0xff]
    %v123 = vld [vmem:[%s6 + $0x20] sm:$0xff]
    %v124 = vld [vmem:[%s6 + $0x28] sm:$0xff]
    %v125 = vld [vmem:[%s6 + $0x30] sm:$0xff]
    %v126 = vld [vmem:[%s6 + $0x38] sm:$0xff]
    %v127 = vld [vmem:[%s6 + $0x40] sm:$0xff]
    %v128 = vld [vmem:[%s6 + $0x48] sm:$0xff]
    %v129 = vld [vmem:[%s6 + $0x50] sm:$0xff]
    %v130 = vld [vmem:[%s6 + $0x58] sm:$0xff]
    %v131 = vld [vmem:[%s6 + $0x60] sm:$0xff]
    %v132 = vld [vmem:[%s6 + $0x68] sm:$0xff]
    %v133 = vld [vmem:[%s6 + $0x70] sm:$0xff]
    %v134 = vld [vmem:[%s6 + $0x78] sm:$0xff]
    %v135 = vld [vmem:[%s7] sm:$0x3]
    %v137 = vlaneseq
    %v138 = vshrl.u32 %v137, 7
    %v139 = vsub.s32 0, %v138
    %v140 = vrot.slane %v135, %v139
    %v141 = vlaneseq
    %v142 = vshrl.u32 %v141, 7
    %v143 = vsub.s32 1, %v142
    %v144 = vrot.slane %v135, %v143
    %v163 = vunpack.c.l.b16 %v119
    %v164 = vunpack.c.h.b16 %v119
    %v165 = vunpack.c.l.b16 %v120
    %v166 = vunpack.c.h.b16 %v120
    %v167 = vunpack.c.l.b16 %v121
    %v168 = vunpack.c.h.b16 %v121
    %v169 = vunpack.c.l.b16 %v122
    %v170 = vunpack.c.h.b16 %v122
    %v171 = vunpack.c.l.b16 %v123
    %v172 = vunpack.c.h.b16 %v123
    %v173 = vunpack.c.l.b16 %v124
    %v174 = vunpack.c.h.b16 %v124
    %v175 = vunpack.c.l.b16 %v125
    %v176 = vunpack.c.h.b16 %v125
    %v177 = vunpack.c.l.b16 %v126
    %v178 = vunpack.c.h.b16 %v126
    %v179 = vunpack.c.l.b16 %v127
    %v180 = vunpack.c.h.b16 %v127
    %v181 = vunpack.c.l.b16 %v128
    %v182 = vunpack.c.h.b16 %v128
    %v183 = vunpack.c.l.b16 %v129
    %v184 = vunpack.c.h.b16 %v129
    %v185 = vunpack.c.l.b16 %v130
    %v186 = vunpack.c.h.b16 %v130
    %v187 = vunpack.c.l.b16 %v131
    %v188 = vunpack.c.h.b16 %v131
    %v189 = vunpack.c.l.b16 %v132
    %v190 = vunpack.c.h.b16 %v132
    %v191 = vunpack.c.l.b16 %v133
    %v192 = vunpack.c.h.b16 %v133
    %v193 = vunpack.c.l.b16 %v134
    %v194 = vunpack.c.h.b16 %v134
    %v195 = vpack.c.b16 %v165, %v163
    %v196 = vpack.c.b16 %v166, %v164
    %v197 = vpack.c.b16 %v169, %v167
    %v198 = vpack.c.b16 %v170, %v168
    %v199 = vpack.c.b16 %v173, %v171
    %v200 = vpack.c.b16 %v174, %v172
    %v201 = vpack.c.b16 %v177, %v175
    %v202 = vpack.c.b16 %v178, %v176
    %v203 = vpack.c.b16 %v181, %v179
    %v204 = vpack.c.b16 %v182, %v180
    %v205 = vpack.c.b16 %v185, %v183
    %v206 = vpack.c.b16 %v186, %v184
    %v207 = vpack.c.b16 %v189, %v187
    %v208 = vpack.c.b16 %v190, %v188
    %v209 = vpack.c.b16 %v193, %v191
    %v210 = vpack.c.b16 %v194, %v192
    %227 = vmatprep.subr.bf16.mxu0 %v196
    %228 = vmatpush1.bf16.msra.mxu0 %v195
    %229 = vmatprep.subr.bf16.mxu0 %v198
    %230 = vmatpush1.bf16.msra.mxu0 %v197
    %231 = vmatprep.subr.bf16.mxu0 %v200
    %232 = vmatpush1.bf16.msra.mxu0 %v199
    %233 = vmatprep.subr.bf16.mxu0 %v202
    %234 = vmatpush1.bf16.msra.mxu0 %v201
    %235 = vmatprep.subr.bf16.mxu0 %v204
    %236 = vmatpush1.bf16.msra.mxu0 %v203
    %237 = vmatprep.subr.bf16.mxu0 %v206
    %238 = vmatpush1.bf16.msra.mxu0 %v205
    %239 = vmatprep.subr.bf16.mxu0 %v208
    %240 = vmatpush1.bf16.msra.mxu0 %v207
    %241 = vmatprep.subr.bf16.mxu0 %v210
    %242 = vmatpush1.bf16.msra.mxu0 %v209
    %243 = vmatprep.subr.bf16.mxu0 0
    %244 = vmatpush1.bf16.msra.mxu0 0
    %245 = vmatprep.subr.bf16.mxu0 0
    %246 = vmatpush1.bf16.msra.mxu0 0
    %247 = vmatprep.subr.bf16.mxu0 0
    %248 = vmatpush1.bf16.msra.mxu0 0
    %249 = vmatprep.subr.bf16.mxu0 0
    %250 = vmatpush1.bf16.msra.mxu0 0
    %251 = vmatprep.subr.bf16.mxu0 0
    %252 = vmatpush1.bf16.msra.mxu0 0
    %253 = vmatprep.subr.bf16.mxu0 0
    %254 = vmatpush1.bf16.msra.mxu0 0
    %255 = vmatprep.subr.bf16.mxu0 0
    %256 = vmatpush1.bf16.msra.mxu0 0
    %257 = vmatprep.subr.bf16.mxu0 0
    %258 = vmatpush1.bf16.msra.mxu0 0
    %259 = vmatprep.mubr.bf16.mxu0 0
    %260 = vmatmul.mubr.bf16.gmra.mrb[0].mxu0 %v118
    %v261 = vpop.f32.mrb[0].mxu0
    %v262 = vadd.f32 %v140, %v261
    %v263 = vpop.f32.mrb[0].mxu0
    %v264 = vadd.f32 %v144, %v263
    %v265 = vpop.f32.mrb[0].mxu0
    %v266 = vpop.f32.mrb[0].mxu0
    %267 = vdwg.mxu0
    %v268 = vld [vmem:[%s2] sm:$0xff]
    %v269 = vld [vmem:[%s2 + $0x8] sm:$0xff]
    %v270 = vadd.f32 %v262, %v268
    %v271 = vadd.f32 %v264, %v269
    %v272 = vmax.f32 %v270, 0.0
    %v273 = vmax.f32 %v271, 0.0
    %v274 = vpack.c.bf16 %v272, %v272
    %v275 = vpack.c.bf16 %v273, %v273
    %v276 = vld [vmem:[%s8] sm:$0xff]
    %v277 = vld [vmem:[%s8 + $0x8] sm:$0xff]
    %v278 = vld [vmem:[%s8 + $0x10] sm:$0xff]
    %v279 = vld [vmem:[%s8 + $0x18] sm:$0xf]
    %v280 = vld [vmem:[%s8 + $0x1c] sm:$0xff]
    %v281 = vld [vmem:[%s8 + $0x24] sm:$0xff]
    %v282 = vld [vmem:[%s8 + $0x2c] sm:$0xff]
    %v283 = vld [vmem:[%s8 + $0x34] sm:$0xf]
    %v284 = vld [vmem:[%s8 + $0x38] sm:$0xff]
    %v285 = vld [vmem:[%s8 + $0x40] sm:$0xff]
    %v286 = vld [vmem:[%s8 + $0x48] sm:$0xff]
    %v287 = vld [vmem:[%s8 + $0x50] sm:$0xf]
    %v288 = vld [vmem:[%s8 + $0x54] sm:$0xff]
    %v289 = vld [vmem:[%s8 + $0x5c] sm:$0xff]
    %v290 = vld [vmem:[%s8 + $0x64] sm:$0xff]
    %v291 = vld [vmem:[%s8 + $0x6c] sm:$0xf]
    %v292 = vld [vmem:[%s8 + $0x70] sm:$0xff]
    %v293 = vld [vmem:[%s8 + $0x78] sm:$0xff]
    %v294 = vld [vmem:[%s8 + $0x80] sm:$0xff]
    %v295 = vld [vmem:[%s8 + $0x88] sm:$0xf]
    %v296 = vld [vmem:[%s8 + $0x8c] sm:$0xff]
    %v297 = vld [vmem:[%s8 + $0x94] sm:$0xff]
    %v298 = vld [vmem:[%s8 + $0x9c] sm:$0xff]
    %v299 = vld [vmem:[%s8 + $0xa4] sm:$0xf]
    %v300 = vld [vmem:[%s8 + $0xa8] sm:$0xff]
    %v301 = vld [vmem:[%s8 + $0xb0] sm:$0xff]
    %v302 = vld [vmem:[%s8 + $0xb8] sm:$0xff]
    %v303 = vld [vmem:[%s8 + $0xc0] sm:$0xf]
    %v304 = vld [vmem:[%s8 + $0xc4] sm:$0xff]
    %v305 = vld [vmem:[%s8 + $0xcc] sm:$0xff]
    %v306 = vld [vmem:[%s8 + $0xd4] sm:$0xff]
    %v307 = vld [vmem:[%s8 + $0xdc] sm:$0xf]
    %v308 = vld [vmem:[%s8 + $0xe0] sm:$0xff]
    %v309 = vld [vmem:[%s8 + $0xe8] sm:$0xff]
    %v310 = vld [vmem:[%s8 + $0xf0] sm:$0xff]
    %v311 = vld [vmem:[%s8 + $0xf8] sm:$0xf]
    %v312 = vld [vmem:[%s8 + $0xfc] sm:$0xff]
    %v313 = vld [vmem:[%s8 + $0x104] sm:$0xff]
    %v314 = vld [vmem:[%s8 + $0x10c] sm:$0xff]
    %v315 = vld [vmem:[%s8 + $0x114] sm:$0xf]
    %v316 = vld [vmem:[%s8 + $0x118] sm:$0xff]
    %v317 = vld [vmem:[%s8 + $0x120] sm:$0xff]
    %v318 = vld [vmem:[%s8 + $0x128] sm:$0xff]
    %v319 = vld [vmem:[%s8 + $0x130] sm:$0xf]
    %v320 = vld [vmem:[%s8 + $0x134] sm:$0xff]
    %v321 = vld [vmem:[%s8 + $0x13c] sm:$0xff]
    %v322 = vld [vmem:[%s8 + $0x144] sm:$0xff]
    %v323 = vld [vmem:[%s8 + $0x14c] sm:$0xf]
    %v324 = vld [vmem:[%s8 + $0x150] sm:$0xff]
    %v325 = vld [vmem:[%s8 + $0x158] sm:$0xff]
    %v326 = vld [vmem:[%s8 + $0x160] sm:$0xff]
    %v327 = vld [vmem:[%s8 + $0x168] sm:$0xf]
    %v328 = vld [vmem:[%s8 + $0x16c] sm:$0xff]
    %v329 = vld [vmem:[%s8 + $0x174] sm:$0xff]
    %v330 = vld [vmem:[%s8 + $0x17c] sm:$0xff]
    %v331 = vld [vmem:[%s8 + $0x184] sm:$0xf]
    %v332 = vld [vmem:[%s8 + $0x188] sm:$0xff]
    %v333 = vld [vmem:[%s8 + $0x190] sm:$0xff]
    %v334 = vld [vmem:[%s8 + $0x198] sm:$0xff]
    %v335 = vld [vmem:[%s8 + $0x1a0] sm:$0xf]
    %v336 = vld [vmem:[%s8 + $0x1a4] sm:$0xff]
    %v337 = vld [vmem:[%s8 + $0x1ac] sm:$0xff]
    %v338 = vld [vmem:[%s8 + $0x1b4] sm:$0xff]
    %v339 = vld [vmem:[%s8 + $0x1bc] sm:$0xf]
    %v340 = vld [vmem:[%s8 + $0x1c0] sm:$0xff]
    %v341 = vld [vmem:[%s8 + $0x1c8] sm:$0xff]
    %v342 = vld [vmem:[%s8 + $0x1d0] sm:$0xff]
    %v343 = vld [vmem:[%s8 + $0x1d8] sm:$0xf]
    %v344 = vld [vmem:[%s8 + $0x1dc] sm:$0xff]
    %v345 = vld [vmem:[%s8 + $0x1e4] sm:$0xff]
    %v346 = vld [vmem:[%s8 + $0x1ec] sm:$0xff]
    %v347 = vld [vmem:[%s8 + $0x1f4] sm:$0xf]
    %v348 = vld [vmem:[%s8 + $0x1f8] sm:$0xff]
    %v349 = vld [vmem:[%s8 + $0x200] sm:$0xff]
    %v350 = vld [vmem:[%s8 + $0x208] sm:$0xff]
    %v351 = vld [vmem:[%s8 + $0x210] sm:$0xf]
    %v352 = vld [vmem:[%s8 + $0x214] sm:$0xff]
    %v353 = vld [vmem:[%s8 + $0x21c] sm:$0xff]
    %v354 = vld [vmem:[%s8 + $0x224] sm:$0xff]
    %v355 = vld [vmem:[%s8 + $0x22c] sm:$0xf]
    %v356 = vld [vmem:[%s8 + $0x230] sm:$0xff]
    %v357 = vld [vmem:[%s8 + $0x238] sm:$0xff]
    %v358 = vld [vmem:[%s8 + $0x240] sm:$0xff]
    %v359 = vld [vmem:[%s8 + $0x248] sm:$0xf]
    %v360 = vld [vmem:[%s8 + $0x24c] sm:$0xff]
    %v361 = vld [vmem:[%s8 + $0x254] sm:$0xff]
    %v362 = vld [vmem:[%s8 + $0x25c] sm:$0xff]
    %v363 = vld [vmem:[%s8 + $0x264] sm:$0xf]
    %v364 = vld [vmem:[%s8 + $0x268] sm:$0xff]
    %v365 = vld [vmem:[%s8 + $0x270] sm:$0xff]
    %v366 = vld [vmem:[%s8 + $0x278] sm:$0xff]
    %v367 = vld [vmem:[%s8 + $0x280] sm:$0xf]
    %v368 = vld [vmem:[%s8 + $0x284] sm:$0xff]
    %v369 = vld [vmem:[%s8 + $0x28c] sm:$0xff]
    %v370 = vld [vmem:[%s8 + $0x294] sm:$0xff]
    %v371 = vld [vmem:[%s8 + $0x29c] sm:$0xf]
    %v372 = vld [vmem:[%s8 + $0x2a0] sm:$0xff]
    %v373 = vld [vmem:[%s8 + $0x2a8] sm:$0xff]
    %v374 = vld [vmem:[%s8 + $0x2b0] sm:$0xff]
    %v375 = vld [vmem:[%s8 + $0x2b8] sm:$0xf]
    %v376 = vld [vmem:[%s8 + $0x2bc] sm:$0xff]
    %v377 = vld [vmem:[%s8 + $0x2c4] sm:$0xff]
    %v378 = vld [vmem:[%s8 + $0x2cc] sm:$0xff]
    %v379 = vld [vmem:[%s8 + $0x2d4] sm:$0xf]
    %v380 = vld [vmem:[%s8 + $0x2d8] sm:$0xff]
    %v381 = vld [vmem:[%s8 + $0x2e0] sm:$0xff]
    %v382 = vld [vmem:[%s8 + $0x2e8] sm:$0xff]
    %v383 = vld [vmem:[%s8 + $0x2f0] sm:$0xf]
    %v384 = vld [vmem:[%s8 + $0x2f4] sm:$0xff]
    %v385 = vld [vmem:[%s8 + $0x2fc] sm:$0xff]
    %v386 = vld [vmem:[%s8 + $0x304] sm:$0xff]
    %v387 = vld [vmem:[%s8 + $0x30c] sm:$0xf]
    %v388 = vld [vmem:[%s8 + $0x310] sm:$0xff]
    %v389 = vld [vmem:[%s8 + $0x318] sm:$0xff]
    %v390 = vld [vmem:[%s8 + $0x320] sm:$0xff]
    %v391 = vld [vmem:[%s8 + $0x328] sm:$0xf]
    %v392 = vld [vmem:[%s8 + $0x32c] sm:$0xff]
    %v393 = vld [vmem:[%s8 + $0x334] sm:$0xff]
    %v394 = vld [vmem:[%s8 + $0x33c] sm:$0xff]
    %v395 = vld [vmem:[%s8 + $0x344] sm:$0xf]
    %v396 = vld [vmem:[%s8 + $0x348] sm:$0xff]
    %v397 = vld [vmem:[%s8 + $0x350] sm:$0xff]
    %v398 = vld [vmem:[%s8 + $0x358] sm:$0xff]
    %v399 = vld [vmem:[%s8 + $0x360] sm:$0xf]
    %v400 = vld [vmem:[%s8 + $0x364] sm:$0xff]
    %v401 = vld [vmem:[%s8 + $0x36c] sm:$0xff]
    %v402 = vld [vmem:[%s8 + $0x374] sm:$0xff]
    %v403 = vld [vmem:[%s8 + $0x37c] sm:$0xf]
    %v404 = vld [vmem:[%s9] sm:$0x7f]
    %v406 = vlaneseq
    %v407 = vshrl.u32 %v406, 7
    %v408 = vsub.s32 0, %v407
    %v409 = vrot.slane %v404, %v408
    %v410 = vlaneseq
    %v411 = vshrl.u32 %v410, 7
    %v412 = vsub.s32 1, %v411
    %v413 = vrot.slane %v404, %v412
    %v414 = vlaneseq
    %v415 = vshrl.u32 %v414, 7
    %v416 = vsub.s32 2, %v415
    %v417 = vrot.slane %v404, %v416
    %v418 = vlaneseq
    %v419 = vshrl.u32 %v418, 7
    %v420 = vsub.s32 3, %v419
    %v421 = vrot.slane %v404, %v420
    %v422 = vlaneseq
    %v423 = vshrl.u32 %v422, 7
    %v424 = vsub.s32 4, %v423
    %v425 = vrot.slane %v404, %v424
    %v426 = vlaneseq
    %v427 = vshrl.u32 %v426, 7
    %v428 = vsub.s32 5, %v427
    %v429 = vrot.slane %v404, %v428
    %v430 = vlaneseq
    %v431 = vshrl.u32 %v430, 7
    %v432 = vsub.s32 6, %v431
    %v433 = vrot.slane %v404, %v432
    %v569 = vunpack.c.l.b16 %v276
    %v570 = vunpack.c.h.b16 %v276
    %v571 = vunpack.c.l.b16 %v277
    %v572 = vunpack.c.h.b16 %v277
    %v573 = vunpack.c.l.b16 %v278
    %v574 = vunpack.c.h.b16 %v278
    %v575 = vunpack.c.l.b16 %v279
    %v576 = vunpack.c.l.b16 %v280
    %v577 = vunpack.c.h.b16 %v280
    %v578 = vunpack.c.l.b16 %v281
    %v579 = vunpack.c.h.b16 %v281
    %v580 = vunpack.c.l.b16 %v282
    %v581 = vunpack.c.h.b16 %v282
    %v582 = vunpack.c.l.b16 %v283
    %v583 = vunpack.c.l.b16 %v284
    %v584 = vunpack.c.h.b16 %v284
    %v585 = vunpack.c.l.b16 %v285
    %v586 = vunpack.c.h.b16 %v285
    %v587 = vunpack.c.l.b16 %v286
    %v588 = vunpack.c.h.b16 %v286
    %v589 = vunpack.c.l.b16 %v287
    %v590 = vunpack.c.l.b16 %v288
    %v591 = vunpack.c.h.b16 %v288
    %v592 = vunpack.c.l.b16 %v289
    %v593 = vunpack.c.h.b16 %v289
    %v594 = vunpack.c.l.b16 %v290
    %v595 = vunpack.c.h.b16 %v290
    %v596 = vunpack.c.l.b16 %v291
    %v597 = vunpack.c.l.b16 %v292
    %v598 = vunpack.c.h.b16 %v292
    %v599 = vunpack.c.l.b16 %v293
    %v600 = vunpack.c.h.b16 %v293
    %v601 = vunpack.c.l.b16 %v294
    %v602 = vunpack.c.h.b16 %v294
    %v603 = vunpack.c.l.b16 %v295
    %v604 = vunpack.c.l.b16 %v296
    %v605 = vunpack.c.h.b16 %v296
    %v606 = vunpack.c.l.b16 %v297
    %v607 = vunpack.c.h.b16 %v297
    %v608 = vunpack.c.l.b16 %v298
    %v609 = vunpack.c.h.b16 %v298
    %v610 = vunpack.c.l.b16 %v299
    %v611 = vunpack.c.l.b16 %v300
    %v612 = vunpack.c.h.b16 %v300
    %v613 = vunpack.c.l.b16 %v301
    %v614 = vunpack.c.h.b16 %v301
    %v615 = vunpack.c.l.b16 %v302
    %v616 = vunpack.c.h.b16 %v302
    %v617 = vunpack.c.l.b16 %v303
    %v618 = vunpack.c.l.b16 %v304
    %v619 = vunpack.c.h.b16 %v304
    %v620 = vunpack.c.l.b16 %v305
    %v621 = vunpack.c.h.b16 %v305
    %v622 = vunpack.c.l.b16 %v306
    %v623 = vunpack.c.h.b16 %v306
    %v624 = vunpack.c.l.b16 %v307
    %v625 = vunpack.c.l.b16 %v308
    %v626 = vunpack.c.h.b16 %v308
    %v627 = vunpack.c.l.b16 %v309
    %v628 = vunpack.c.h.b16 %v309
    %v629 = vunpack.c.l.b16 %v310
    %v630 = vunpack.c.h.b16 %v310
    %v631 = vunpack.c.l.b16 %v311
    %v632 = vunpack.c.l.b16 %v312
    %v633 = vunpack.c.h.b16 %v312
    %v634 = vunpack.c.l.b16 %v313
    %v635 = vunpack.c.h.b16 %v313
    %v636 = vunpack.c.l.b16 %v314
    %v637 = vunpack.c.h.b16 %v314
    %v638 = vunpack.c.l.b16 %v315
    %v639 = vunpack.c.l.b16 %v316
    %v640 = vunpack.c.h.b16 %v316
    %v641 = vunpack.c.l.b16 %v317
    %v642 = vunpack.c.h.b16 %v317
    %v643 = vunpack.c.l.b16 %v318
    %v644 = vunpack.c.h.b16 %v318
    %v645 = vunpack.c.l.b16 %v319
    %v646 = vunpack.c.l.b16 %v320
    %v647 = vunpack.c.h.b16 %v320
    %v648 = vunpack.c.l.b16 %v321
    %v649 = vunpack.c.h.b16 %v321
    %v650 = vunpack.c.l.b16 %v322
    %v651 = vunpack.c.h.b16 %v322
    %v652 = vunpack.c.l.b16 %v323
    %v653 = vunpack.c.l.b16 %v324
    %v654 = vunpack.c.h.b16 %v324
    %v655 = vunpack.c.l.b16 %v325
    %v656 = vunpack.c.h.b16 %v325
    %v657 = vunpack.c.l.b16 %v326
    %v658 = vunpack.c.h.b16 %v326
    %v659 = vunpack.c.l.b16 %v327
    %v660 = vunpack.c.l.b16 %v328
    %v661 = vunpack.c.h.b16 %v328
    %v662 = vunpack.c.l.b16 %v329
    %v663 = vunpack.c.h.b16 %v329
    %v664 = vunpack.c.l.b16 %v330
    %v665 = vunpack.c.h.b16 %v330
    %v666 = vunpack.c.l.b16 %v331
    %v667 = vunpack.c.l.b16 %v332
    %v668 = vunpack.c.h.b16 %v332
    %v669 = vunpack.c.l.b16 %v333
    %v670 = vunpack.c.h.b16 %v333
    %v671 = vunpack.c.l.b16 %v334
    %v672 = vunpack.c.h.b16 %v334
    %v673 = vunpack.c.l.b16 %v335
    %v674 = vunpack.c.l.b16 %v336
    %v675 = vunpack.c.h.b16 %v336
    %v676 = vunpack.c.l.b16 %v337
    %v677 = vunpack.c.h.b16 %v337
    %v678 = vunpack.c.l.b16 %v338
    %v679 = vunpack.c.h.b16 %v338
    %v680 = vunpack.c.l.b16 %v339
    %v681 = vunpack.c.l.b16 %v340
    %v682 = vunpack.c.h.b16 %v340
    %v683 = vunpack.c.l.b16 %v341
    %v684 = vunpack.c.h.b16 %v341
    %v685 = vunpack.c.l.b16 %v342
    %v686 = vunpack.c.h.b16 %v342
    %v687 = vunpack.c.l.b16 %v343
    %v688 = vunpack.c.l.b16 %v344
    %v689 = vunpack.c.h.b16 %v344
    %v690 = vunpack.c.l.b16 %v345
    %v691 = vunpack.c.h.b16 %v345
    %v692 = vunpack.c.l.b16 %v346
    %v693 = vunpack.c.h.b16 %v346
    %v694 = vunpack.c.l.b16 %v347
    %v695 = vunpack.c.l.b16 %v348
    %v696 = vunpack.c.h.b16 %v348
    %v697 = vunpack.c.l.b16 %v349
    %v698 = vunpack.c.h.b16 %v349
    %v699 = vunpack.c.l.b16 %v350
    %v700 = vunpack.c.h.b16 %v350
    %v701 = vunpack.c.l.b16 %v351
    %v702 = vunpack.c.l.b16 %v352
    %v703 = vunpack.c.h.b16 %v352
    %v704 = vunpack.c.l.b16 %v353
    %v705 = vunpack.c.h.b16 %v353
    %v706 = vunpack.c.l.b16 %v354
    %v707 = vunpack.c.h.b16 %v354
    %v708 = vunpack.c.l.b16 %v355
    %v709 = vunpack.c.l.b16 %v356
    %v710 = vunpack.c.h.b16 %v356
    %v711 = vunpack.c.l.b16 %v357
    %v712 = vunpack.c.h.b16 %v357
    %v713 = vunpack.c.l.b16 %v358
    %v714 = vunpack.c.h.b16 %v358
    %v715 = vunpack.c.l.b16 %v359
    %v716 = vunpack.c.l.b16 %v360
    %v717 = vunpack.c.h.b16 %v360
    %v718 = vunpack.c.l.b16 %v361
    %v719 = vunpack.c.h.b16 %v361
    %v720 = vunpack.c.l.b16 %v362
    %v721 = vunpack.c.h.b16 %v362
    %v722 = vunpack.c.l.b16 %v363
    %v723 = vunpack.c.l.b16 %v364
    %v724 = vunpack.c.h.b16 %v364
    %v725 = vunpack.c.l.b16 %v365
    %v726 = vunpack.c.h.b16 %v365
    %v727 = vunpack.c.l.b16 %v366
    %v728 = vunpack.c.h.b16 %v366
    %v729 = vunpack.c.l.b16 %v367
    %v730 = vunpack.c.l.b16 %v368
    %v731 = vunpack.c.h.b16 %v368
    %v732 = vunpack.c.l.b16 %v369
    %v733 = vunpack.c.h.b16 %v369
    %v734 = vunpack.c.l.b16 %v370
    %v735 = vunpack.c.h.b16 %v370
    %v736 = vunpack.c.l.b16 %v371
    %v737 = vunpack.c.l.b16 %v372
    %v738 = vunpack.c.h.b16 %v372
    %v739 = vunpack.c.l.b16 %v373
    %v740 = vunpack.c.h.b16 %v373
    %v741 = vunpack.c.l.b16 %v374
    %v742 = vunpack.c.h.b16 %v374
    %v743 = vunpack.c.l.b16 %v375
    %v744 = vunpack.c.l.b16 %v376
    %v745 = vunpack.c.h.b16 %v376
    %v746 = vunpack.c.l.b16 %v377
    %v747 = vunpack.c.h.b16 %v377
    %v748 = vunpack.c.l.b16 %v378
    %v749 = vunpack.c.h.b16 %v378
    %v750 = vunpack.c.l.b16 %v379
    %v751 = vunpack.c.l.b16 %v380
    %v752 = vunpack.c.h.b16 %v380
    %v753 = vunpack.c.l.b16 %v381
    %v754 = vunpack.c.h.b16 %v381
    %v755 = vunpack.c.l.b16 %v382
    %v756 = vunpack.c.h.b16 %v382
    %v757 = vunpack.c.l.b16 %v383
    %v758 = vunpack.c.l.b16 %v384
    %v759 = vunpack.c.h.b16 %v384
    %v760 = vunpack.c.l.b16 %v385
    %v761 = vunpack.c.h.b16 %v385
    %v762 = vunpack.c.l.b16 %v386
    %v763 = vunpack.c.h.b16 %v386
    %v764 = vunpack.c.l.b16 %v387
    %v765 = vunpack.c.l.b16 %v388
    %v766 = vunpack.c.h.b16 %v388
    %v767 = vunpack.c.l.b16 %v389
    %v768 = vunpack.c.h.b16 %v389
    %v769 = vunpack.c.l.b16 %v390
    %v770 = vunpack.c.h.b16 %v390
    %v771 = vunpack.c.l.b16 %v391
    %v772 = vunpack.c.l.b16 %v392
    %v773 = vunpack.c.h.b16 %v392
    %v774 = vunpack.c.l.b16 %v393
    %v775 = vunpack.c.h.b16 %v393
    %v776 = vunpack.c.l.b16 %v394
    %v777 = vunpack.c.h.b16 %v394
    %v778 = vunpack.c.l.b16 %v395
    %v779 = vunpack.c.l.b16 %v396
    %v780 = vunpack.c.h.b16 %v396
    %v781 = vunpack.c.l.b16 %v397
    %v782 = vunpack.c.h.b16 %v397
    %v783 = vunpack.c.l.b16 %v398
    %v784 = vunpack.c.h.b16 %v398
    %v785 = vunpack.c.l.b16 %v399
    %v786 = vunpack.c.l.b16 %v400
    %v787 = vunpack.c.h.b16 %v400
    %v788 = vunpack.c.l.b16 %v401
    %v789 = vunpack.c.h.b16 %v401
    %v790 = vunpack.c.l.b16 %v402
    %v791 = vunpack.c.h.b16 %v402
    %v792 = vunpack.c.l.b16 %v403
    %v793 = vpack.c.b16 %v576, %v569
    %v794 = vpack.c.b16 %v577, %v570
    %v795 = vpack.c.b16 %v578, %v571
    %v796 = vpack.c.b16 %v579, %v572
    %v797 = vpack.c.b16 %v580, %v573
    %v798 = vpack.c.b16 %v581, %v574
    %v799 = vpack.c.b16 %v582, %v575
    %v800 = vpack.c.b16 %v590, %v583
    %v801 = vpack.c.b16 %v591, %v584
    %v802 = vpack.c.b16 %v592, %v585
    %v803 = vpack.c.b16 %v593, %v586
    %v804 = vpack.c.b16 %v594, %v587
    %v805 = vpack.c.b16 %v595, %v588
    %v806 = vpack.c.b16 %v596, %v589
    %v807 = vpack.c.b16 %v604, %v597
    %v808 = vpack.c.b16 %v605, %v598
    %v809 = vpack.c.b16 %v606, %v599
    %v810 = vpack.c.b16 %v607, %v600
    %v811 = vpack.c.b16 %v608, %v601
    %v812 = vpack.c.b16 %v609, %v602
    %v813 = vpack.c.b16 %v610, %v603
    %v814 = vpack.c.b16 %v618, %v611
    %v815 = vpack.c.b16 %v619, %v612
    %v816 = vpack.c.b16 %v620, %v613
    %v817 = vpack.c.b16 %v621, %v614
    %v818 = vpack.c.b16 %v622, %v615
    %v819 = vpack.c.b16 %v623, %v616
    %v820 = vpack.c.b16 %v624, %v617
    %v821 = vpack.c.b16 %v632, %v625
    %v822 = vpack.c.b16 %v633, %v626
    %v823 = vpack.c.b16 %v634, %v627
    %v824 = vpack.c.b16 %v635, %v628
    %v825 = vpack.c.b16 %v636, %v629
    %v826 = vpack.c.b16 %v637, %v630
    %v827 = vpack.c.b16 %v638, %v631
    %v828 = vpack.c.b16 %v646, %v639
    %v829 = vpack.c.b16 %v647, %v640
    %v830 = vpack.c.b16 %v648, %v641
    %v831 = vpack.c.b16 %v649, %v642
    %v832 = vpack.c.b16 %v650, %v643
    %v833 = vpack.c.b16 %v651, %v644
    %v834 = vpack.c.b16 %v652, %v645
    %v835 = vpack.c.b16 %v660, %v653
    %v836 = vpack.c.b16 %v661, %v654
    %v837 = vpack.c.b16 %v662, %v655
    %v838 = vpack.c.b16 %v663, %v656
    %v839 = vpack.c.b16 %v664, %v657
    %v840 = vpack.c.b16 %v665, %v658
    %v841 = vpack.c.b16 %v666, %v659
    %v842 = vpack.c.b16 %v674, %v667
    %v843 = vpack.c.b16 %v675, %v668
    %v844 = vpack.c.b16 %v676, %v669
    %v845 = vpack.c.b16 %v677, %v670
    %v846 = vpack.c.b16 %v678, %v671
    %v847 = vpack.c.b16 %v679, %v672
    %v848 = vpack.c.b16 %v680, %v673
    %v849 = vpack.c.b16 %v688, %v681
    %v850 = vpack.c.b16 %v689, %v682
    %v851 = vpack.c.b16 %v690, %v683
    %v852 = vpack.c.b16 %v691, %v684
    %v853 = vpack.c.b16 %v692, %v685
    %v854 = vpack.c.b16 %v693, %v686
    %v855 = vpack.c.b16 %v694, %v687
    %v856 = vpack.c.b16 %v702, %v695
    %v857 = vpack.c.b16 %v703, %v696
    %v858 = vpack.c.b16 %v704, %v697
    %v859 = vpack.c.b16 %v705, %v698
    %v860 = vpack.c.b16 %v706, %v699
    %v861 = vpack.c.b16 %v707, %v700
    %v862 = vpack.c.b16 %v708, %v701
    %v863 = vpack.c.b16 %v716, %v709
    %v864 = vpack.c.b16 %v717, %v710
    %v865 = vpack.c.b16 %v718, %v711
    %v866 = vpack.c.b16 %v719, %v712
    %v867 = vpack.c.b16 %v720, %v713
    %v868 = vpack.c.b16 %v721, %v714
    %v869 = vpack.c.b16 %v722, %v715
    %v870 = vpack.c.b16 %v730, %v723
    %v871 = vpack.c.b16 %v731, %v724
    %v872 = vpack.c.b16 %v732, %v725
    %v873 = vpack.c.b16 %v733, %v726
    %v874 = vpack.c.b16 %v734, %v727
    %v875 = vpack.c.b16 %v735, %v728
    %v876 = vpack.c.b16 %v736, %v729
    %v877 = vpack.c.b16 %v744, %v737
    %v878 = vpack.c.b16 %v745, %v738
    %v879 = vpack.c.b16 %v746, %v739
    %v880 = vpack.c.b16 %v747, %v740
    %v881 = vpack.c.b16 %v748, %v741
    %v882 = vpack.c.b16 %v749, %v742
    %v883 = vpack.c.b16 %v750, %v743
    %v884 = vpack.c.b16 %v758, %v751
    %v885 = vpack.c.b16 %v759, %v752
    %v886 = vpack.c.b16 %v760, %v753
    %v887 = vpack.c.b16 %v761, %v754
    %v888 = vpack.c.b16 %v762, %v755
    %v889 = vpack.c.b16 %v763, %v756
    %v890 = vpack.c.b16 %v764, %v757
    %v891 = vpack.c.b16 %v772, %v765
    %v892 = vpack.c.b16 %v773, %v766
    %v893 = vpack.c.b16 %v774, %v767
    %v894 = vpack.c.b16 %v775, %v768
    %v895 = vpack.c.b16 %v776, %v769
    %v896 = vpack.c.b16 %v777, %v770
    %v897 = vpack.c.b16 %v778, %v771
    %v898 = vpack.c.b16 %v786, %v779
    %v899 = vpack.c.b16 %v787, %v780
    %v900 = vpack.c.b16 %v788, %v781
    %v901 = vpack.c.b16 %v789, %v782
    %v902 = vpack.c.b16 %v790, %v783
    %v903 = vpack.c.b16 %v791, %v784
    %v904 = vpack.c.b16 %v792, %v785
    %1017 = vmatprep.subr.bf16.mxu0 %v794
    %1018 = vmatpush1.bf16.msra.mxu0 %v793
    %1019 = vmatprep.subr.bf16.mxu0 %v801
    %1020 = vmatpush1.bf16.msra.mxu0 %v800
    %1021 = vmatprep.subr.bf16.mxu0 %v808
    %1022 = vmatpush1.bf16.msra.mxu0 %v807
    %1023 = vmatprep.subr.bf16.mxu0 %v815
    %1024 = vmatpush1.bf16.msra.mxu0 %v814
    %1025 = vmatprep.subr.bf16.mxu0 %v822
    %1026 = vmatpush1.bf16.msra.mxu0 %v821
    %1027 = vmatprep.subr.bf16.mxu0 %v829
    %1028 = vmatpush1.bf16.msra.mxu0 %v828
    %1029 = vmatprep.subr.bf16.mxu0 %v836
    %1030 = vmatpush1.bf16.msra.mxu0 %v835
    %1031 = vmatprep.subr.bf16.mxu0 %v843
    %1032 = vmatpush1.bf16.msra.mxu0 %v842
    %1033 = vmatprep.subr.bf16.mxu0 %v850
    %1034 = vmatpush1.bf16.msra.mxu0 %v849
    %1035 = vmatprep.subr.bf16.mxu0 %v857
    %1036 = vmatpush1.bf16.msra.mxu0 %v856
    %1037 = vmatprep.subr.bf16.mxu0 %v864
    %1038 = vmatpush1.bf16.msra.mxu0 %v863
    %1039 = vmatprep.subr.bf16.mxu0 %v871
    %1040 = vmatpush1.bf16.msra.mxu0 %v870
    %1041 = vmatprep.subr.bf16.mxu0 %v878
    %1042 = vmatpush1.bf16.msra.mxu0 %v877
    %1043 = vmatprep.subr.bf16.mxu0 %v885
    %1044 = vmatpush1.bf16.msra.mxu0 %v884
    %1045 = vmatprep.subr.bf16.mxu0 %v892
    %1046 = vmatpush1.bf16.msra.mxu0 %v891
    %1047 = vmatprep.subr.bf16.mxu0 %v899
    %1048 = vmatpush1.bf16.msra.mxu0 %v898
    %1049 = vmatprep.mubr.bf16.mxu0 %v275
    %1050 = vmatmul.mubr.bf16.gmra.mrb[0].mxu0 %v274
    %v1051 = vpop.f32.mrb[0].mxu0
    %v1052 = vadd.f32 %v409, %v1051
    %v1053 = vpop.f32.mrb[0].mxu0
    %v1054 = vadd.f32 %v413, %v1053
    %v1055 = vpop.f32.mrb[0].mxu0
    %v1056 = vpop.f32.mrb[0].mxu0
    %1057 = vdwg.mxu0
    %1058 = vmatprep.subr.bf16.mxu0 %v796
    %1059 = vmatpush1.bf16.msra.mxu0 %v795
    %1060 = vmatprep.subr.bf16.mxu0 %v803
    %1061 = vmatpush1.bf16.msra.mxu0 %v802
    %1062 = vmatprep.subr.bf16.mxu0 %v810
    %1063 = vmatpush1.bf16.msra.mxu0 %v809
    %1064 = vmatprep.subr.bf16.mxu0 %v817
    %1065 = vmatpush1.bf16.msra.mxu0 %v816
    %1066 = vmatprep.subr.bf16.mxu0 %v824
    %1067 = vmatpush1.bf16.msra.mxu0 %v823
    %1068 = vmatprep.subr.bf16.mxu0 %v831
    %1069 = vmatpush1.bf16.msra.mxu0 %v830
    %1070 = vmatprep.subr.bf16.mxu0 %v838
    %1071 = vmatpush1.bf16.msra.mxu0 %v837
    %1072 = vmatprep.subr.bf16.mxu0 %v845
    %1073 = vmatpush1.bf16.msra.mxu0 %v844
    %1074 = vmatprep.subr.bf16.mxu0 %v852
    %1075 = vmatpush1.bf16.msra.mxu0 %v851
    %1076 = vmatprep.subr.bf16.mxu0 %v859
    %1077 = vmatpush1.bf16.msra.mxu0 %v858
    %1078 = vmatprep.subr.bf16.mxu0 %v866
    %1079 = vmatpush1.bf16.msra.mxu0 %v865
    %1080 = vmatprep.subr.bf16.mxu0 %v873
    %1081 = vmatpush1.bf16.msra.mxu0 %v872
    %1082 = vmatprep.subr.bf16.mxu0 %v880
    %1083 = vmatpush1.bf16.msra.mxu0 %v879
    %1084 = vmatprep.subr.bf16.mxu0 %v887
    %1085 = vmatpush1.bf16.msra.mxu0 %v886
    %1086 = vmatprep.subr.bf16.mxu0 %v894
    %1087 = vmatpush1.bf16.msra.mxu0 %v893
    %1088 = vmatprep.subr.bf16.mxu0 %v901
    %1089 = vmatpush1.bf16.msra.mxu0 %v900
    %1090 = vmatprep.mubr.bf16.mxu0 %v275
    %1091 = vmatmul.mubr.bf16.gmra.mrb[0].mxu0 %v274
    %v1092 = vpop.f32.mrb[0].mxu0
    %v1093 = vadd.f32 %v417, %v1092
    %v1094 = vpop.f32.mrb[0].mxu0
    %v1095 = vadd.f32 %v421, %v1094
    %v1096 = vpop.f32.mrb[0].mxu0
    %v1097 = vpop.f32.mrb[0].mxu0
    %1098 = vdwg.mxu0
    %1099 = vmatprep.subr.bf16.mxu0 %v798
    %1100 = vmatpush1.bf16.msra.mxu0 %v797
    %1101 = vmatprep.subr.bf16.mxu0 %v805
    %1102 = vmatpush1.bf16.msra.mxu0 %v804
    %1103 = vmatprep.subr.bf16.mxu0 %v812
    %1104 = vmatpush1.bf16.msra.mxu0 %v811
    %1105 = vmatprep.subr.bf16.mxu0 %v819
    %1106 = vmatpush1.bf16.msra.mxu0 %v818
    %1107 = vmatprep.subr.bf16.mxu0 %v826
    %1108 = vmatpush1.bf16.msra.mxu0 %v825
    %1109 = vmatprep.subr.bf16.mxu0 %v833
    %1110 = vmatpush1.bf16.msra.mxu0 %v832
    %1111 = vmatprep.subr.bf16.mxu0 %v840
    %1112 = vmatpush1.bf16.msra.mxu0 %v839
    %1113 = vmatprep.subr.bf16.mxu0 %v847
    %1114 = vmatpush1.bf16.msra.mxu0 %v846
    %1115 = vmatprep.subr.bf16.mxu0 %v854
    %1116 = vmatpush1.bf16.msra.mxu0 %v853
    %1117 = vmatprep.subr.bf16.mxu0 %v861
    %1118 = vmatpush1.bf16.msra.mxu0 %v860
    %1119 = vmatprep.subr.bf16.mxu0 %v868
    %1120 = vmatpush1.bf16.msra.mxu0 %v867
    %1121 = vmatprep.subr.bf16.mxu0 %v875
    %1122 = vmatpush1.bf16.msra.mxu0 %v874
    %1123 = vmatprep.subr.bf16.mxu0 %v882
    %1124 = vmatpush1.bf16.msra.mxu0 %v881
    %1125 = vmatprep.subr.bf16.mxu0 %v889
    %1126 = vmatpush1.bf16.msra.mxu0 %v888
    %1127 = vmatprep.subr.bf16.mxu0 %v896
    %1128 = vmatpush1.bf16.msra.mxu0 %v895
    %1129 = vmatprep.subr.bf16.mxu0 %v903
    %1130 = vmatpush1.bf16.msra.mxu0 %v902
    %1131 = vmatprep.mubr.bf16.mxu0 %v275
    %1132 = vmatmul.mubr.bf16.gmra.mrb[0].mxu0 %v274
    %v1133 = vpop.f32.mrb[0].mxu0
    %v1134 = vadd.f32 %v425, %v1133
    %v1135 = vpop.f32.mrb[0].mxu0
    %v1136 = vadd.f32 %v429, %v1135
    %v1137 = vpop.f32.mrb[0].mxu0
    %v1138 = vpop.f32.mrb[0].mxu0
    %1139 = vdwg.mxu0
    %1140 = vmatprep.subr.bf16.mxu0 0
    %1141 = vmatpush1.bf16.msra.mxu0 %v799
    %1142 = vmatprep.subr.bf16.mxu0 0
    %1143 = vmatpush1.bf16.msra.mxu0 %v806
    %1144 = vmatprep.subr.bf16.mxu0 0
    %1145 = vmatpush1.bf16.msra.mxu0 %v813
    %1146 = vmatprep.subr.bf16.mxu0 0
    %1147 = vmatpush1.bf16.msra.mxu0 %v820
    %1148 = vmatprep.subr.bf16.mxu0 0
    %1149 = vmatpush1.bf16.msra.mxu0 %v827
    %1150 = vmatprep.subr.bf16.mxu0 0
    %1151 = vmatpush1.bf16.msra.mxu0 %v834
    %1152 = vmatprep.subr.bf16.mxu0 0
    %1153 = vmatpush1.bf16.msra.mxu0 %v841
    %1154 = vmatprep.subr.bf16.mxu0 0
    %1155 = vmatpush1.bf16.msra.mxu0 %v848
    %1156 = vmatprep.subr.bf16.mxu0 0
    %1157 = vmatpush1.bf16.msra.mxu0 %v855
    %1158 = vmatprep.subr.bf16.mxu0 0
    %1159 = vmatpush1.bf16.msra.mxu0 %v862
    %1160 = vmatprep.subr.bf16.mxu0 0
    %1161 = vmatpush1.bf16.msra.mxu0 %v869
    %1162 = vmatprep.subr.bf16.mxu0 0
    %1163 = vmatpush1.bf16.msra.mxu0 %v876
    %1164 = vmatprep.subr.bf16.mxu0 0
    %1165 = vmatpush1.bf16.msra.mxu0 %v883
    %1166 = vmatprep.subr.bf16.mxu0 0
    %1167 = vmatpush1.bf16.msra.mxu0 %v890
    %1168 = vmatprep.subr.bf16.mxu0 0
    %1169 = vmatpush1.bf16.msra.mxu0 %v897
    %1170 = vmatprep.subr.bf16.mxu0 0
    %1171 = vmatpush1.bf16.msra.mxu0 %v904
    %1172 = vmatprep.mubr.bf16.mxu0 %v275
    %1173 = vmatmul.mubr.bf16.gmra.mrb[0].mxu0 %v274
    %v1174 = vpop.f32.mrb[0].mxu0
    %v1175 = vadd.f32 %v433, %v1174
    %v1176 = vpop.f32.mrb[0].mxu0
    %v1177 = vpop.f32.mrb[0].mxu0
    %v1178 = vpop.f32.mrb[0].mxu0
    %1179 = vdwg.mxu0
    %v1180 = vxor.u32 %v1052, 2147483648
    %v1181 = vxor.u32 %v1054, 2147483648
    %v1182 = vxor.u32 %v1093, 2147483648
    %v1183 = vxor.u32 %v1095, 2147483648
    %v1184 = vxor.u32 %v1134, 2147483648
    %v1185 = vxor.u32 %v1136, 2147483648
    %v1186 = vxor.u32 %v1175, 2147483648
    %v1187 = vmul.f32 %v1180, 1.442695
    %v1188 = vpow.pop %v1187
    %v1189 = vmul.f32 %v1181, 1.442695
    %v1190 = vpow.pop %v1189
    %v1191 = vmul.f32 %v1182, 1.442695
    %v1192 = vpow.pop %v1191
    %v1193 = vmul.f32 %v1183, 1.442695
    %v1194 = vpow.pop %v1193
    %v1195 = vmul.f32 %v1184, 1.442695
    %v1196 = vpow.pop %v1195
    %v1197 = vmul.f32 %v1185, 1.442695
    %v1198 = vpow.pop %v1197
    %v1199 = vmul.f32 %v1186, 1.442695
    %v1200 = vpow.pop %v1199
    %v1201 = vadd.f32 %v1188, 1.0
    %v1202 = vadd.f32 %v1190, 1.0
    %v1203 = vadd.f32 %v1192, 1.0
    %v1204 = vadd.f32 %v1194, 1.0
    %v1205 = vadd.f32 %v1196, 1.0
    %v1206 = vadd.f32 %v1198, 1.0
    %v1207 = vadd.f32 %v1200, 1.0
    %v1208 = vrcp.pop %v1201
    %v1209 = vmul.f32 1.0, %v1208
    %v1210 = vrcp.pop %v1202
    %v1211 = vmul.f32 1.0, %v1210
    %v1212 = vrcp.pop %v1203
    %v1213 = vmul.f32 1.0, %v1212
    %v1214 = vrcp.pop %v1204
    %v1215 = vmul.f32 1.0, %v1214
    %v1216 = vrcp.pop %v1205
    %v1217 = vmul.f32 1.0, %v1216
    %v1218 = vrcp.pop %v1206
    %v1219 = vmul.f32 1.0, %v1218
    %v1220 = vrcp.pop %v1207
    %v1221 = vmul.f32 1.0, %v1220
    %1222 = vst [vmem:[#allocation2] sm:$0xff] %v1209
    %1223 = vst [vmem:[#allocation2 + $0x8] sm:$0xff] %v1211
    %1224 = vst [vmem:[#allocation2 + $0x10] sm:$0xff] %v1213
    %1225 = vst [vmem:[#allocation2 + $0x18] sm:$0xff] %v1215
    %1226 = vst [vmem:[#allocation2 + $0x20] sm:$0xff] %v1217
    %1227 = vst [vmem:[#allocation2 + $0x28] sm:$0xff] %v1219
    %vm1228 = vcmask 130048
    %1229 = vst.msk [vmem:[#allocation2 + $0x30] sm:$0xff] %vm1228, %v1221
    // Predicated region
    $region42: #{tpu_custom_call.1} parent=1 // pred_check
      _
    $region43: #{tpu_custom_call.1} parent=1 // pred_check_branch
      %1231 = sbr.rel (0) target = $region45
    $region44: #{tpu_custom_call.1} parent=1 // pred_region
      %s1233 = ssub.s32 896, 896
      %1234 = vsyncadd [#allocation3], %s1233
      %s1236 = sshll.u32 [#allocation2], 4
      %s1237 = int_to_ptr.vmem [resolvable:$true] %s1236
      %1239 = dma.vmem_to_hbm [thread:$0]  %s1237, 896, %s10, [#allocation3]
    $region45: #{tpu_custom_call.1} parent=1 // pred_fallthru
      _
    // Predicated region
    $region46: #{tpu_custom_call.1} parent=1 // pred_check
      _
    $region47: #{tpu_custom_call.1} parent=1 // pred_check_branch
      %1241 = sbr.rel (0) target = $region49
    $region48: #{tpu_custom_call.1} parent=1 // pred_region
      %1242 = dma.done [#allocation3], 896
    $region49: #{tpu_custom_call.1} parent=1 // pred_fallthru
      _
    %1243 = vsyncpa [#allocation3], 1

</llo_original>
